<compile_context>
chip_gen: v7x
topology: tpu7x:2x2x1
jax: 0.10.0
libtpu: 0.0.40
codegen_flags: <defaults>
</compile_context>

<pallas_src>
import functools

import jax
import jax.numpy as jnp
import numpy as np
from jax.experimental import pallas as pl
from jax.experimental.pallas import tpu as pltpu

# Keep both the in-kernel MXU matmuls and the pure-JAX reference at full f32
# precision so the correctness check is tight.
jax.config.update("jax_default_matmul_precision", "highest")

KERNELS = [3, 5, 7]
PADDINGS = [1, 4, 9]
DILATIONS = [1, 2, 3]


# ----------------------------------------------------------------------------
# pltpu.roll direction probe (one tiny kernel, run once, outside jit).
# The kernel needs shifted(j) = x[(j + s) % L]; the probe pins down whether
# pltpu.roll follows the jnp.roll convention (out[j] = x[j - shift]) or the
# opposite, so the 100+ static shift amounts are guaranteed correct.
# ----------------------------------------------------------------------------
def _probe_roll_convention():
    def k(x_ref, o_ref):
        o_ref[...] = pltpu.roll(x_ref[...], 1, 1)

    x = jnp.arange(8 * 128, dtype=jnp.float32).reshape(8, 128)
    out = pl.pallas_call(
        k, out_shape=jax.ShapeDtypeStruct((8, 128), jnp.float32))(x)
    out = np.asarray(jax.block_until_ready(out))
    if out[0, 1] == 0.0 and out[0, 0] == 127.0:
        return True            # matches jnp.roll: out[j] = x[(j - shift) % n]
    if out[0, 1] == 2.0 and out[0, 0] == 1.0:
        return False           # opposite:        out[j] = x[(j + shift) % n]
    raise RuntimeError("could not determine pltpu.roll semantics")


_ROLL_IS_JNP = None


# ----------------------------------------------------------------------------
# Fused kernel: one grid step = NT batch images, everything lane-dense (C, L).
# ----------------------------------------------------------------------------
def _fused_attention_kernel(
        x_ref,                     # (C, L)       input slab
        wp1_ref,                   # (C, C)       proj_1x1_1 weight
        w1_ref,                    # (3, C, C)    conv1 weight, split per branch
        wp2_ref,                   # (C, C)       proj_1x1_2 weight
        bias_ref,                  # (4, C, L)    [bp1, b0, b1_eff, bp2] planes
        p0_ref,                    # (25, C, L)   conv0   weight*mask planes
        p1_ref,                    # (9,  C, L)   branch0 weight*mask planes
        p2_ref,                    # (25, C, L)   branch1 weight*mask planes
        p3_ref,                    # (49, C, L)   branch2 weight*mask planes
        o_ref,                     # (C, L)       output slab
        *, shifts, L, roll_is_jnp):
    f32 = jnp.float32

    def lane_shift(v, r):
        # returns y with y[:, j] = v[:, (j - r) % L]  (r is a jnp.roll amount)
        if r == 0:
            return v
        amt = r if roll_is_jnp else (L - r)
        return pltpu.roll(v, amt, 1)

    def dwconv(v, p_ref, ss):
        # Depthwise conv = sum over taps of (weight*mask plane) * shifted slab.
        # 4 round-robin accumulators break the serial add chain (ILP) while
        # keeping vreg pressure low.
        n_acc = 4
        accs = [None] * n_acc
        for k, r in enumerate(ss):
            t = p_ref[k] * lane_shift(v, r)
            i = k % n_acc
            accs[i] = t if accs[i] is None else accs[i] + t
        out = accs[0]
        for i in range(1, n_acc):
            if accs[i] is not None:
                out = out + accs[i]
        return out

    x = x_ref[...]                                                   # (C, L)

    # ---- proj_1x1_1 (MXU) + GELU; g stays live in vregs ---------------------
    a = jnp.dot(wp1_ref[...], x, preferred_element_type=f32) + bias_ref[0]
    # TODO(synk): PyTorch nn.GELU() defaults to the exact erf form; the tanh
    # approximation is used here (and in the in-script reference) because erf
    # is not a guaranteed Mosaic lowering.
    g = jax.nn.gelu(a, approximate=True)

    # ---- conv0: depthwise 5x5, pad 2 (roll + plane mul-add) -----------------
    attn = dwconv(g, p0_ref, shifts[0]) + bias_ref[1]

    # ---- three dilated depthwise branches, conv1 (3C->C) folded into three
    # ---- accumulated MXU dots; branch biases folded into bias_ref[2] --------
    m = jnp.dot(w1_ref[0], dwconv(attn, p1_ref, shifts[1]),
                preferred_element_type=f32)
    m = m + jnp.dot(w1_ref[1], dwconv(attn, p2_ref, shifts[2]),
                    preferred_element_type=f32)
    m = m + jnp.dot(w1_ref[2], dwconv(attn, p3_ref, shifts[3]),
                    preferred_element_type=f32)
    m = m + bias_ref[2]

    # ---- gate, proj_1x1_2 (MXU), residual -----------------------------------
    y = g * m
    z = jnp.dot(wp2_ref[...], y, preferred_element_type=f32) + bias_ref[3]
    o_ref[...] = x + z


# ----------------------------------------------------------------------------
# Host-side precompute: per-tap (weight x boundary-mask) planes + roll amounts.
# ----------------------------------------------------------------------------
def _make_dw_planes(w, K, dil, pad, H, W, NT):
    C = w.shape[0]
    HW = H * W
    L = NT * HW
    hh = np.arange(H)[:, None]
    ww = np.arange(W)[None, :]
    masks, shifts = [], []
    for kh in range(K):
        dh = kh * dil - pad
        for kw in range(K):
            dw = kw * dil - pad
            m = ((hh + dh >= 0) & (hh + dh < H) &
                 (ww + dw >= 0) & (ww + dw < W)).astype(np.float32).reshape(HW)
            masks.append(np.tile(m, NT))                    # (L,)
            # want shifted[:, j] = v[:, (j + dh*W + dw) % L]  ->  jnp.roll by -s
            shifts.append((-(dh * W + dw)) % L)
    masks = jnp.asarray(np.stack(masks))                    # (K*K, L)
    planes = w.reshape(C, K * K).T[:, :, None] * masks[:, None, :]
    return planes.astype(jnp.float32), tuple(shifts)        # (K*K, C, L)


# ----------------------------------------------------------------------------
# Wrapper.
# ----------------------------------------------------------------------------
@functools.partial(jax.jit, static_argnames=("roll_is_jnp",))
def _attention_forward(x, params, *, roll_is_jnp):
    N, C, H, W = x.shape
    HW = H * W
    f32 = jnp.float32

    # Batch blocking: pack NT images into the lane axis of each grid step
    # (wide RHS, fewer fatter steps) while keeping >= 2 grid steps when
    # possible so both v7x TensorCores get work.
    NT = N // 2 if (N % 2 == 0 and N >= 2) else 1
    G = N // NT
    L = NT * HW

    x32 = x.astype(f32)
    # (N, C, H, W) -> (G, C, NT*HW): lane axis = [image, h, w]
    xr = x32.reshape(G, NT, C, HW).transpose(0, 2, 1, 3).reshape(G, C, L)

    # Depthwise weight*mask planes + static roll amounts.
    p0, s0 = _make_dw_planes(params["w0"].astype(f32), 5, 1, 2, H, W, NT)
    p1, s1 = _make_dw_planes(params["ws0"].astype(f32), KERNELS[0],
                             DILATIONS[0], PADDINGS[0], H, W, NT)
    p2, s2 = _make_dw_planes(params["ws1"].astype(f32), KERNELS[1],
                             DILATIONS[1], PADDINGS[1], H, W, NT)
    p3, s3 = _make_dw_planes(params["ws2"].astype(f32), KERNELS[2],
                             DILATIONS[2], PADDINGS[2], H, W, NT)

    wp1 = params["wp1"].astype(f32)
    wp2 = params["wp2"].astype(f32)
    # conv1 (C, 3C) -> per-branch (3, C, C) blocks.
    w1_blocks = params["w1"].astype(f32).reshape(C, 3, C).transpose(1, 0, 2)
    # Fold branch biases through conv1 into an effective conv1 bias.
    bs = jnp.stack([params["bs0"], params["bs1"], params["bs2"]]).astype(f32)
    b1_eff = params["b1"].astype(f32) + jnp.einsum("ioc,ic->o", w1_blocks, bs)
    bias_planes = jnp.broadcast_to(
        jnp.stack([params["bp1"].astype(f32), params["b0"].astype(f32),
                   b1_eff, params["bp2"].astype(f32)])[:, :, None],
        (4, C, L)).astype(f32)

    kernel = functools.partial(_fused_attention_kernel,
                               shifts=(s0, s1, s2, s3), L=L,
                               roll_is_jnp=roll_is_jnp)

    def const(shape):  # whole-array VMEM block, constant across grid steps
        return pl.BlockSpec(shape, lambda n: (0,) * len(shape))

    out = pl.pallas_call(
        kernel,
        out_shape=jax.ShapeDtypeStruct((G, C, L), f32),
        grid=(G,),
        in_specs=[
            pl.BlockSpec((None, C, L), lambda n: (n, 0, 0)),   # x slab
            const((C, C)),                                     # proj_1x1_1 W
            const((3, C, C)),                                  # conv1 blocks
            const((C, C)),                                     # proj_1x1_2 W
            const((4, C, L)),                                  # bias planes
            const(p0.shape),                                   # conv0 planes
            const(p1.shape),                                   # branch planes
            const(p2.shape),
            const(p3.shape),
        ],
        out_specs=pl.BlockSpec((None, C, L), lambda n: (n, 0, 0)),
        compiler_params=pltpu.CompilerParams(
            dimension_semantics=("parallel",),
            # actual per-step VMEM use is ~1 MiB (planes ~0.5 MiB, constant
            # index maps so they are fetched once) -- far under v7x's 64 MiB.
            vmem_limit_bytes=32 * 1024 * 1024),
    )(xr, wp1, w1_blocks, wp2, bias_planes, p0, p1, p2, p3)

    return out.reshape(G, C, NT, HW).transpose(0, 2, 1, 3).reshape(N, C, H, W)


def attention_module_pallas(x, params):
    global _ROLL_IS_JNP
    if _ROLL_IS_JNP is None:
        _ROLL_IS_JNP = _probe_roll_convention()
    return _attention_forward(x, params, roll_is_jnp=_ROLL_IS_JNP)


# ----------------------------------------------------------------------------
# Parameter init + pure-JAX reference (correctness check only).
# ----------------------------------------------------------------------------
def init_params(key, C):
    ks = jax.random.split(key, 14)
    p = {}
    p["wp1"] = 0.1 * jax.random.normal(ks[0], (C, C), jnp.float32)
    p["bp1"] = 0.1 * jax.random.normal(ks[1], (C,), jnp.float32)
    p["w0"] = 0.1 * jax.random.normal(ks[2], (C, 5, 5), jnp.float32)
    p["b0"] = 0.1 * jax.random.normal(ks[3], (C,), jnp.float32)
    for i, K in enumerate(KERNELS):
        p[f"ws{i}"] = 0.1 * jax.random.normal(ks[4 + 2 * i], (C, K, K), jnp.float32)
        p[f"bs{i}"] = 0.1 * jax.random.normal(ks[5 + 2 * i], (C,), jnp.float32)
    p["w1"] = 0.1 * jax.random.normal(ks[10], (C, 3 * C), jnp.float32)
    p["b1"] = 0.1 * jax.random.normal(ks[11], (C,), jnp.float32)
    p["wp2"] = 0.1 * jax.random.normal(ks[12], (C, C), jnp.float32)
    p["bp2"] = 0.1 * jax.random.normal(ks[13], (C,), jnp.float32)
    return p


def _ref_dw(x, w, b, pad, dil):
    C = x.shape[1]
    out = jax.lax.conv_general_dilated(
        x, w[:, None, :, :], window_strides=(1, 1),
        padding=((pad, pad), (pad, pad)), rhs_dilation=(dil, dil),
        dimension_numbers=("NCHW", "OIHW", "NCHW"), feature_group_count=C)
    return out + b[None, :, None, None]


def attention_module_ref(x, p):
    a = jnp.einsum("oc,nchw->nohw", p["wp1"], x) + p["bp1"][None, :, None, None]
    g = jax.nn.gelu(a, approximate=True)
    attn = _ref_dw(g, p["w0"], p["b0"], 2, 1)
    sp = [_ref_dw(attn, p[f"ws{i}"], p[f"bs{i}"], PADDINGS[i], DILATIONS[i])
          for i in range(3)]
    cat = jnp.concatenate(sp, axis=1)
    m = jnp.einsum("oj,njhw->nohw", p["w1"], cat) + p["b1"][None, :, None, None]
    y = g * m
    z = jnp.einsum("oc,nchw->nohw", p["wp2"], y) + p["bp2"][None, :, None, None]
    return x + z


if __name__ == "__main__":
    key = jax.random.PRNGKey(0)
    k_x, k_p = jax.random.split(key)
    N, C, H, W = 2, 4, 16, 16
    x = jax.random.normal(k_x, (N, C, H, W), jnp.float32)
    params = init_params(k_p, C)

    out = jax.block_until_ready(attention_module_pallas(x, params))
    ref = jax.block_until_ready(attention_module_ref(x, params))
    np.testing.assert_allclose(np.asarray(out), np.asarray(ref),
                               rtol=5e-4, atol=5e-4)

    print("KERNEL_OK")
</pallas_src>

<mosaic_0001>
module attributes {stable_mosaic.version = 11 : i64} {
  func.func @k(%arg0: memref<8x128xf32, #tpu.memory_space<vmem>>, %arg1: memref<8x128xf32, #tpu.memory_space<vmem>>) attributes {dimension_semantics = [], scalar_prefetch = 0 : i64, scratch_operands = 0 : i64, tpu.core_type = #tpu.core_type<tc>} {
    %c0 = arith.constant 0 : index
    %c0_0 = arith.constant 0 : index
    %0 = vector.load %arg0[%c0, %c0_0] : memref<8x128xf32, #tpu.memory_space<vmem>>, vector<8x128xf32>
    %c1_i32 = arith.constant 1 : i32
    %1 = tpu.dynamic_rotate %0 by %c1_i32 dim 1 : vector<8x128xf32>, i32 -> vector<8x128xf32>
    %c0_1 = arith.constant 0 : index
    %c0_2 = arith.constant 0 : index
    %2 = vector.load %arg1[%c0_1, %c0_2] : memref<8x128xf32, #tpu.memory_space<vmem>>, vector<8x128xf32>
    tpu.vector_store %arg1[%c0_1, %c0_2], %1 {strides = array<i32>} : memref<8x128xf32, #tpu.memory_space<vmem>>, vector<8x128xf32>,
    return
  }
}

</mosaic_0001>

<llo_original>
// kernel: tpu_custom_call.1
$region0: #{tpu_custom_call.1}
  #allocation0 [shape = 'u32[]', space=smem, size = 0x4, offset = 0x4, fixed_abs, tag = 'smem constant byte address 0x4 - core index']
  #allocation1 [shape = 'u32[144,128]{1,0:T(1,128)}', space=vmem, size = 0x12000, scoped, tag = 'internal scratch']
  %s0 = inlined_call_operand.hbm [shape: f32[8,128], index: 0, kind: input, shape index: {}]
  %s1 = inlined_call_operand.hbm [shape: f32[8,128], index: 1, kind: output, shape index: {}]
  %s2 = sld [smem:[#allocation0]]
  $region18: #{tpu_custom_call.1} parent=0
    _
  %s4 = ssub.s32 1, %s2
  %s5 = scalar_select 0, %s4, %s2
  $region1: #{tpu_custom_call.1} parent=0
    #allocation2 [shape = 'u8[4096]{0}', space=vmem, size = 0x1000, scoped, tag = 'input window, operand 0, single buffered']
    #allocation3 [shape = 's32[1]{0}', space=sflag, size = 0x4, scoped, tag = 'scoped memory for tpu_custom_call.1']
    #allocation4 [shape = 's32[1]{0}', space=sflag, size = 0x4, scoped, tag = 'scoped memory for tpu_custom_call.1']
    #allocation5 [shape = 'u8[4096]{0}', space=vmem, size = 0x1000, scoped, tag = 'output window, operand 0, single buffered']
    %6 = vsyncpa [#allocation3], 0
    %7 = vsyncpa [#allocation4], 0
    // Predicated region
    $region2: #{tpu_custom_call.1} parent=1 // pred_check
      _
    $region3: #{tpu_custom_call.1} parent=1 // pred_check_branch
      %9 = sbr.rel (0) target = $region5
    $region4: #{tpu_custom_call.1} parent=1 // pred_region
      %s11 = ssub.s32 128, 128
      %12 = vsyncadd [#allocation3], %s11
      %s14 = sshll.u32 [#allocation2], 4
      %s15 = int_to_ptr.vmem [resolvable:$true] %s14
      %17 = dma.hbm_to_vmem [thread:$0]  %s0, 128, %s15, [#allocation3]
    $region5: #{tpu_custom_call.1} parent=1 // pred_fallthru
      _
    // Predicated region
    $region6: #{tpu_custom_call.1} parent=1 // pred_check
      _
    $region7: #{tpu_custom_call.1} parent=1 // pred_check_branch
      %19 = sbr.rel (0) target = $region9
    $region8: #{tpu_custom_call.1} parent=1 // pred_region
      %20 = dma.done [#allocation3], 128
    $region9: #{tpu_custom_call.1} parent=1 // pred_fallthru
      _
    %v21 = vld [vmem:[#allocation2] sm:$0xff]
    %22 = vrot.lane.b32.xlu0 %v21, 1
    %v23 = vpop.permute.xlu0 %22
    %24 = vst [vmem:[#allocation5] sm:$0xff] %v23
    // Predicated region
    $region10: #{tpu_custom_call.1} parent=1 // pred_check
      _
    $region11: #{tpu_custom_call.1} parent=1 // pred_check_branch
      %26 = sbr.rel (0) target = $region13
    $region12: #{tpu_custom_call.1} parent=1 // pred_region
      %s28 = ssub.s32 128, 128
      %29 = vsyncadd [#allocation4], %s28
      %s31 = sshll.u32 [#allocation5], 4
      %s32 = int_to_ptr.vmem [resolvable:$true] %s31
      %34 = dma.vmem_to_hbm [thread:$0]  %s32, 128, %s1, [#allocation4]
    $region13: #{tpu_custom_call.1} parent=1 // pred_fallthru
      _
    // Predicated region
    $region14: #{tpu_custom_call.1} parent=1 // pred_check
      _
    $region15: #{tpu_custom_call.1} parent=1 // pred_check_branch
      %36 = sbr.rel (0) target = $region17
    $region16: #{tpu_custom_call.1} parent=1 // pred_region
      %37 = dma.done [#allocation4], 128
    $region17: #{tpu_custom_call.1} parent=1 // pred_fallthru
      _
    %38 = vsyncpa [#allocation3], 1
    %39 = vsyncpa [#allocation4], 1

</llo_original>
